<compile_context>
chip_gen: v6e
topology: v6e:2x2x1
jax: 0.10.0
libtpu: 0.0.40
codegen_flags: <defaults>
</compile_context>

<pallas_src>
import jax
import jax.numpy as jnp
from jax.experimental import pallas as pl
from jax.experimental.pallas import tpu as pltpu

_LANE = 128
_BF16_SUBLANE = 16                      # bf16 packs 16 sublanes per vreg
_VMEM_TILE_BUDGET = 32 * 1024 * 1024    # bytes assumed available when sizing tiles
_VMEM_LIMIT = 48 * 1024 * 1024          # explicit scoped-VMEM limit (< v7x 64 MiB physical)


def _round_up(x: int, m: int) -> int:
    return ((x + m - 1) // m) * m


def dqn_kernel(x_ref, w1_ref, b1_ref, w2_ref, b2_ref, w3_ref, b3_ref, o_ref):
    # bf16 matmuls on the MXU with f32 accumulation; bias-add + ReLU in f32
    # (no bf16 VPU on v5e), cast to bf16 only to feed the next dot.
    x = x_ref[...]

    h1 = jnp.dot(x, w1_ref[...], preferred_element_type=jnp.float32) + b1_ref[...]
    h1 = jnp.maximum(h1, 0.0).astype(jnp.bfloat16)

    h2 = jnp.dot(h1, w2_ref[...], preferred_element_type=jnp.float32) + b2_ref[...]
    h2 = jnp.maximum(h2, 0.0).astype(jnp.bfloat16)

    out = jnp.dot(h2, w3_ref[...], preferred_element_type=jnp.float32) + b3_ref[...]
    o_ref[...] = out.astype(o_ref.dtype)


def prepare_params(params):
    """One-time param prep: bf16 weights, lane-padded obs/action dims.

    Do this once and reuse the result; it removes a full extra HBM read+write
    of all weights from every forward call.
    """
    w1, b1, w2, b2, w3, b3 = params
    n_obs, hidden = w1.shape
    n_actions = w3.shape[1]
    n_obs_pad = _round_up(n_obs, _LANE)
    n_out_pad = _round_up(n_actions, _LANE)

    w1p = jnp.pad(w1, ((0, n_obs_pad - n_obs), (0, 0))).astype(jnp.bfloat16)
    w2p = w2.astype(jnp.bfloat16)
    w3p = jnp.pad(w3, ((0, 0), (0, n_out_pad - n_actions))).astype(jnp.bfloat16)
    b1p = b1.reshape(1, hidden).astype(jnp.float32)
    b2p = b2.reshape(1, hidden).astype(jnp.float32)
    b3p = jnp.pad(b3.reshape(1, n_actions),
                  ((0, 0), (0, n_out_pad - n_actions))).astype(jnp.float32)

    return dict(tensors=(w1p, b1p, w2p, b2p, w3p, b3p),
                n_obs=n_obs, n_obs_pad=n_obs_pad,
                n_actions=n_actions, n_out_pad=n_out_pad, hidden=hidden)


def _pick_batch_tile(B, n_obs_pad, hidden, n_out_pad, out_itemsize,
                     tile_b_max, min_grid_steps):
    """Batch tile sized to (a) fit a VMEM budget, (b) give >= min_grid_steps even
    grid steps (v7x megacore), (c) minimize padding waste, (d) be a bf16
    sublane multiple."""
    # Per-row VMEM: double-buffered x tile + double-buffered output tile
    # + f32 activation scratch for the two hidden layers.
    per_row = 2 * n_obs_pad * 2 + 2 * n_out_pad * out_itemsize + 4 * hidden * 4
    # Resident weights/biases (counted double-buffered to be conservative).
    weight_bytes = 2 * 2 * (n_obs_pad * hidden + hidden * hidden + hidden * n_out_pad)
    weight_bytes += 2 * 4 * (hidden + hidden + n_out_pad)

    avail = max(_VMEM_TILE_BUDGET - weight_bytes, per_row * _BF16_SUBLANE)
    vmem_cap = max((avail // per_row) // _BF16_SUBLANE * _BF16_SUBLANE, _BF16_SUBLANE)
    cap = min(_round_up(tile_b_max, _BF16_SUBLANE), vmem_cap)

    num_tiles = max(min_grid_steps, pl.cdiv(B, cap))
    if num_tiles % 2:
        num_tiles += 1                         # even step count -> both v7x TCs busy
    tile_b = _round_up(pl.cdiv(B, num_tiles), _BF16_SUBLANE)
    return tile_b, num_tiles


def dqn_forward(x, prepared, *, tile_b_max=1024, min_grid_steps=2,
                out_dtype=jnp.float32, return_padded=False):
    """x: (B, *) arbitrary trailing dims (flattened like torch's .view).

    `prepared` is the output of prepare_params. For tiny B (the act() path)
    this call is launch/DMA-latency bound; batch act() calls or fall back to
    plain XLA there.
    """
    w1, b1, w2, b2, w3, b3 = prepared["tensors"]
    n_obs, n_obs_pad = prepared["n_obs"], prepared["n_obs_pad"]
    n_actions, n_out_pad = prepared["n_actions"], prepared["n_out_pad"]
    hidden = prepared["hidden"]

    B = x.shape[0]
    x2d = x.reshape(B, -1).astype(jnp.bfloat16)
    assert x2d.shape[1] == n_obs, "flattened observation dim mismatch"

    tile_b, num_tiles = _pick_batch_tile(
        B, n_obs_pad, hidden, n_out_pad, jnp.dtype(out_dtype).itemsize,
        tile_b_max, min_grid_steps)
    b_pad = num_tiles * tile_b

    pad_rows = b_pad - B
    pad_cols = n_obs_pad - n_obs
    if pad_rows or pad_cols:
        x2d = jnp.pad(x2d, ((0, pad_rows), (0, pad_cols)))

    def resident(shape):
        # Full-array block, constant block index -> VMEM-resident across grid steps.
        return pl.BlockSpec(shape, lambda i: (0, 0))

    out_padded = pl.pallas_call(
        dqn_kernel,
        out_shape=jax.ShapeDtypeStruct((b_pad, n_out_pad), out_dtype),
        grid=(num_tiles,),
        in_specs=[
            pl.BlockSpec((tile_b, n_obs_pad), lambda i: (i, 0)),   # x: tiled over batch
            resident(w1.shape), resident(b1.shape),
            resident(w2.shape), resident(b2.shape),
            resident(w3.shape), resident(b3.shape),
        ],
        out_specs=pl.BlockSpec((tile_b, n_out_pad), lambda i: (i, 0)),
        compiler_params=pltpu.CompilerParams(
            dimension_semantics=("parallel",),        # shards batch tiles across TCs
            vmem_limit_bytes=_VMEM_LIMIT,
        ),
    )(x2d, w1, b1, w2, b2, w3, b3)

    if return_padded:
        # Padded rows hold relu(bias)-derived garbage and padded action columns
        # hold the padded bias values; slice / mask before any argmax.
        return out_padded
    return out_padded[:B, :n_actions]


def init_params(key, n_observations, n_actions, hidden=256):
    """Deterministic synthetic init (PyTorch-Linear-style uniform bounds), f32 master copy."""
    keys = jax.random.split(key, 6)

    def lin(kw, kb, fan_in, fan_out):
        bound = 1.0 / jnp.sqrt(fan_in)
        w = jax.random.uniform(kw, (fan_in, fan_out), jnp.float32, -bound, bound)
        b = jax.random.uniform(kb, (1, fan_out), jnp.float32, -bound, bound)
        return w, b

    w1, b1 = lin(keys[0], keys[1], n_observations, hidden)
    w2, b2 = lin(keys[2], keys[3], hidden, hidden)
    w3, b3 = lin(keys[4], keys[5], hidden, n_actions)
    return (w1, b1, w2, b2, w3, b3)


if __name__ == "__main__":
    key = jax.random.PRNGKey(0)
    k_x, k_p = jax.random.split(key)

    batch = 2
    n_observations = 8
    n_actions = 4

    x = jax.random.normal(k_x, (batch, n_observations), jnp.float32)
    params = init_params(k_p, n_observations, n_actions)
    prepared = prepare_params(params)     # one-time bf16 cast + lane padding

    out = jax.block_until_ready(dqn_forward(x, prepared))

    # Pure-JAX f32 reference of the PyTorch forward (kernel runs bf16 matmuls
    # with f32 accumulation -> loose tolerances).
    w1, b1, w2, b2, w3, b3 = params
    ref = jnp.maximum(x.reshape(batch, -1) @ w1 + b1, 0.0)
    ref = jnp.maximum(ref @ w2 + b2, 0.0)
    ref = ref @ w3 + b3

    assert out.shape == (batch, n_actions)
    assert jnp.allclose(out, ref, atol=2e-2, rtol=2e-2), (
        f"max abs err {jnp.max(jnp.abs(out - ref))}")

    print("KERNEL_OK")
</pallas_src>

<mosaic_0001>
module attributes {stable_mosaic.version = 11 : i64} {
  func.func @dqn_kernel(%arg0: i32, %arg1: memref<16x128xbf16, #tpu.memory_space<vmem>>, %arg2: memref<128x256xbf16, #tpu.memory_space<vmem>>, %arg3: memref<1x256xf32, #tpu.memory_space<vmem>>, %arg4: memref<256x256xbf16, #tpu.memory_space<vmem>>, %arg5: memref<1x256xf32, #tpu.memory_space<vmem>>, %arg6: memref<256x128xbf16, #tpu.memory_space<vmem>>, %arg7: memref<1x128xf32, #tpu.memory_space<vmem>>, %arg8: memref<16x128xf32, #tpu.memory_space<vmem>>) attributes {dimension_semantics = [#tpu.dimension_semantics<parallel>], iteration_bounds = array<i64: 2>, scalar_prefetch = 0 : i64, scratch_operands = 0 : i64, tpu.core_type = #tpu.core_type<tc>, window_params = [{transform_indices = @transform_0, window_bounds = array<i64: 16, 128>}, {pipeline_mode = #tpu.pipeline_mode<synchronous>, transform_indices = @transform_1, window_bounds = array<i64: 128, 256>}, {pipeline_mode = #tpu.pipeline_mode<synchronous>, transform_indices = @transform_2, window_bounds = array<i64: 1, 256>}, {pipeline_mode = #tpu.pipeline_mode<synchronous>, transform_indices = @transform_3, window_bounds = array<i64: 256, 256>}, {pipeline_mode = #tpu.pipeline_mode<synchronous>, transform_indices = @transform_4, window_bounds = array<i64: 1, 256>}, {pipeline_mode = #tpu.pipeline_mode<synchronous>, transform_indices = @transform_5, window_bounds = array<i64: 256, 128>}, {pipeline_mode = #tpu.pipeline_mode<synchronous>, transform_indices = @transform_6, window_bounds = array<i64: 1, 128>}, {transform_indices = @transform_7, window_bounds = array<i64: 16, 128>}]} {
    %c0 = arith.constant 0 : index
    %c0_0 = arith.constant 0 : index
    %0 = vector.load %arg1[%c0, %c0_0] : memref<16x128xbf16, #tpu.memory_space<vmem>>, vector<16x128xbf16>
    %c0_1 = arith.constant 0 : index
    %c0_2 = arith.constant 0 : index
    %1 = vector.load %arg2[%c0_1, %c0_2] : memref<128x256xbf16, #tpu.memory_space<vmem>>, vector<128x256xbf16>
    %cst = arith.constant dense<0.000000e+00> : vector<16x256xf32>
    %2 = tpu.matmul %0, %1, %cst {dimension_numbers = #tpu.dot_dimension_numbers<[1], [0], [0], [1], [0, 0, 1, 1], [], []>} : vector<16x128xbf16>, vector<128x256xbf16>, vector<16x256xf32> -> vector<16x256xf32>
    %c0_3 = arith.constant 0 : index
    %c0_4 = arith.constant 0 : index
    %3 = vector.load %arg3[%c0_3, %c0_4] : memref<1x256xf32, #tpu.memory_space<vmem>>, vector<1x256xf32>
    %4 = vector.broadcast %3 : vector<1x256xf32> to vector<16x256xf32>
    %5 = arith.addf %2, %4 : vector<16x256xf32>
    %cst_5 = arith.constant 0.000000e+00 : f32
    %6 = vector.broadcast %cst_5 : f32 to vector<16x256xf32>
    %7 = arith.maximumf %5, %6 : vector<16x256xf32>
    %8 = arith.truncf %7 : vector<16x256xf32> to vector<16x256xbf16>
    %c0_6 = arith.constant 0 : index
    %c0_7 = arith.constant 0 : index
    %9 = vector.load %arg4[%c0_6, %c0_7] : memref<256x256xbf16, #tpu.memory_space<vmem>>, vector<256x256xbf16>
    %cst_8 = arith.constant dense<0.000000e+00> : vector<16x256xf32>
    %10 = tpu.matmul %8, %9, %cst_8 {dimension_numbers = #tpu.dot_dimension_numbers<[1], [0], [0], [1], [0, 0, 1, 1], [], []>} : vector<16x256xbf16>, vector<256x256xbf16>, vector<16x256xf32> -> vector<16x256xf32>
    %c0_9 = arith.constant 0 : index
    %c0_10 = arith.constant 0 : index
    %11 = vector.load %arg5[%c0_9, %c0_10] : memref<1x256xf32, #tpu.memory_space<vmem>>, vector<1x256xf32>
    %12 = vector.broadcast %11 : vector<1x256xf32> to vector<16x256xf32>
    %13 = arith.addf %10, %12 : vector<16x256xf32>
    %cst_11 = arith.constant 0.000000e+00 : f32
    %14 = vector.broadcast %cst_11 : f32 to vector<16x256xf32>
    %15 = arith.maximumf %13, %14 : vector<16x256xf32>
    %16 = arith.truncf %15 : vector<16x256xf32> to vector<16x256xbf16>
    %c0_12 = arith.constant 0 : index
    %c0_13 = arith.constant 0 : index
    %17 = vector.load %arg6[%c0_12, %c0_13] : memref<256x128xbf16, #tpu.memory_space<vmem>>, vector<256x128xbf16>
    %cst_14 = arith.constant dense<0.000000e+00> : vector<16x128xf32>
    %18 = tpu.matmul %16, %17, %cst_14 {dimension_numbers = #tpu.dot_dimension_numbers<[1], [0], [0], [1], [0, 0, 1, 1], [], []>} : vector<16x256xbf16>, vector<256x128xbf16>, vector<16x128xf32> -> vector<16x128xf32>
    %c0_15 = arith.constant 0 : index
    %c0_16 = arith.constant 0 : index
    %19 = vector.load %arg7[%c0_15, %c0_16] : memref<1x128xf32, #tpu.memory_space<vmem>>, vector<1x128xf32>
    %20 = vector.broadcast %19 : vector<1x128xf32> to vector<16x128xf32>
    %21 = arith.addf %18, %20 : vector<16x128xf32>
    %c0_17 = arith.constant 0 : index
    %c0_18 = arith.constant 0 : index
    %22 = vector.load %arg8[%c0_17, %c0_18] : memref<16x128xf32, #tpu.memory_space<vmem>>, vector<16x128xf32>
    tpu.vector_store %arg8[%c0_17, %c0_18], %21 {strides = array<i32>} : memref<16x128xf32, #tpu.memory_space<vmem>>, vector<16x128xf32>,
    return
  }
  func.func @transform_0(%arg0: i32) -> (i32, i32) {
    %c0_i32 = arith.constant 0 : i32
    %c0_i32_0 = arith.constant 0 : i32
    return %arg0, %c0_i32 : i32, i32
  }
  func.func @transform_1(%arg0: i32) -> (i32, i32) {
    %c0_i32 = arith.constant 0 : i32
    %c0_i32_0 = arith.constant 0 : i32
    %c0_i32_1 = arith.constant 0 : i32
    return %c0_i32, %c0_i32_0 : i32, i32
  }
  func.func @transform_2(%arg0: i32) -> (i32, i32) {
    %c0_i32 = arith.constant 0 : i32
    %c0_i32_0 = arith.constant 0 : i32
    %c0_i32_1 = arith.constant 0 : i32
    return %c0_i32, %c0_i32_0 : i32, i32
  }
  func.func @transform_3(%arg0: i32) -> (i32, i32) {
    %c0_i32 = arith.constant 0 : i32
    %c0_i32_0 = arith.constant 0 : i32
    %c0_i32_1 = arith.constant 0 : i32
    return %c0_i32, %c0_i32_0 : i32, i32
  }
  func.func @transform_4(%arg0: i32) -> (i32, i32) {
    %c0_i32 = arith.constant 0 : i32
    %c0_i32_0 = arith.constant 0 : i32
    %c0_i32_1 = arith.constant 0 : i32
    return %c0_i32, %c0_i32_0 : i32, i32
  }
  func.func @transform_5(%arg0: i32) -> (i32, i32) {
    %c0_i32 = arith.constant 0 : i32
    %c0_i32_0 = arith.constant 0 : i32
    %c0_i32_1 = arith.constant 0 : i32
    return %c0_i32, %c0_i32_0 : i32, i32
  }
  func.func @transform_6(%arg0: i32) -> (i32, i32) {
    %c0_i32 = arith.constant 0 : i32
    %c0_i32_0 = arith.constant 0 : i32
    %c0_i32_1 = arith.constant 0 : i32
    return %c0_i32, %c0_i32_0 : i32, i32
  }
  func.func @transform_7(%arg0: i32) -> (i32, i32) {
    %c0_i32 = arith.constant 0 : i32
    %c0_i32_0 = arith.constant 0 : i32
    return %arg0, %c0_i32 : i32, i32
  }
}

</mosaic_0001>

<llo_original>
// kernel: tpu_custom_call.1
$region0: #{tpu_custom_call.1}
  #allocation0 [shape = 'u32[]', space=smem, size = 0x4, offset = 0x4, fixed_abs, tag = 'smem constant byte address 0x4 - core index']
  #allocation1 [shape = 'u32[144,128]{1,0:T(1,128)}', space=vmem, size = 0x12000, scoped, tag = 'internal scratch']
  %s0 = inlined_call_operand.hbm [shape: bf16[32,128], index: 0, kind: input, shape index: {}]
  %s1 = inlined_call_operand.hbm [shape: bf16[128,256], index: 1, kind: input, shape index: {}]
  %s2 = inlined_call_operand.vmem [shape: f32[1,256], index: 2, kind: input, shape index: {}]
  %s3 = inlined_call_operand.hbm [shape: bf16[256,256], index: 3, kind: input, shape index: {}]
  %s4 = inlined_call_operand.vmem [shape: f32[1,256], index: 4, kind: input, shape index: {}]
  %s5 = inlined_call_operand.hbm [shape: bf16[256,128], index: 5, kind: input, shape index: {}]
  %s6 = inlined_call_operand.vmem [shape: f32[1,128], index: 6, kind: input, shape index: {}]
  %s7 = inlined_call_operand.hbm [shape: f32[32,128], index: 7, kind: output, shape index: {}]
  %s8 = sld [smem:[#allocation0]]
  $region77: #{tpu_custom_call.1} parent=0
    _
  %s10 = ssub.s32 1, %s8
  %s11 = scalar_select 0, %s10, %s8
  $region1: #{tpu_custom_call.1} parent=0
    #allocation2 [shape = 'u8[8192]{0}', space=vmem, size = 0x2000, scoped, tag = 'input window, operand 0']
    #allocation3 [shape = 's32[2]{0}', space=sflag, size = 0x8, scoped, tag = 'scoped memory for tpu_custom_call.1']
    #allocation4 [shape = 's32[2]{0}', space=sflag, size = 0x8, scoped, tag = 'scoped memory for tpu_custom_call.1']
    #allocation5 [shape = 'u8[65536]{0}', space=vmem, size = 0x10000, scoped, tag = 'input window, operand 1, single buffered']
    #allocation6 [shape = 's32[1]{0}', space=sflag, size = 0x4, scoped, tag = 'scoped memory for tpu_custom_call.1']
    #allocation7 [shape = 'u8[131072]{0}', space=vmem, size = 0x20000, scoped, tag = 'input window, operand 3, single buffered']
    #allocation8 [shape = 'u8[65536]{0}', space=vmem, size = 0x10000, scoped, tag = 'input window, operand 5, single buffered']
    #allocation9 [shape = 's32[1]{0}', space=sflag, size = 0x4, scoped, tag = 'scoped memory for tpu_custom_call.1']
    #allocation10 [shape = 'u8[16384]{0}', space=vmem, size = 0x4000, scoped, tag = 'output window, operand 0']
    %12 = vsyncpa [#allocation3], 0
    %s13 = scalar_lea.sflag [#allocation3], 1
    %14 = vsyncpa %s13, 0
    %15 = vsyncpa [#allocation6], 0
    %16 = vsyncpa [#allocation9], 0
    %17 = vsyncpa [#allocation4], 0
    %s18 = scalar_lea.sflag [#allocation4], 1
    %19 = vsyncpa %s18, 0
    loop: start=0, step=1, limit=4
    $region2: #{tpu_custom_call.1} parent=1 // loop_pre_header
      _
    $region3: #{tpu_custom_call.1} parent=1 // loop_header
      %s21 = sphi 0, %s25
      %p22 = scmp.ge.s32.totalorder %s21, 4
      %s31 = sphi 0, %s33
      %s34 = sphi 0, %s31
      %s35 = sphi 0, %s34
      %s51 = sphi 0, %s35
      %s55 = sphi 0, %s55
      %s57 = sphi 0, %s55
      %s58 = sphi 0, %s57
      %s72 = sphi 0, %s58
      %s76 = sphi 0, %s76
      %s78 = sphi 0, %s76
      %s79 = sphi 0, %s78
      %s93 = sphi 0, %s79
      %s97 = sphi 0, %s97
      %s99 = sphi 0, %s97
      %s100 = sphi 0, %s99
      %s114 = sphi 0, %s100
      %s118 = sphi 0, %s118
      %s120 = sphi 0, %s118
      %s121 = sphi 0, %s120
      %s135 = sphi 0, %s121
      %s139 = sphi 0, %s139
      %s141 = sphi 0, %s139
      %s142 = sphi 0, %s141
      %s156 = sphi 0, %s142
      %s160 = sphi 0, %s160
      %s162 = sphi 0, %s160
      %s163 = sphi 0, %s162
      %s177 = sphi 0, %s163
      %s183 = sphi 0, %s185
      %s186 = sphi 0, %s183
      %s187 = sphi 0, %s186
      %s203 = sphi 0, %s187
    $region4: #{tpu_custom_call.1} parent=1 // loop_header_branch
      %24 = sbr.rel (%p22) target = $region8
    $region5: #{tpu_custom_call.1} parent=1 // loop_body
      %s26 = ssub.s32 %s21, 1
      %s27 = ssub.s32 %s21, 2
      %s28 = sadd.s32 %s21, 1
      %s29 = ssub.s32 %s21, %s28
      %p30 = scmp.eq.s32.totalorder %s29, 0
      %s32 = sadd.s32 %s31, 1
      %s33 = scalar_select %p30, %s31, %s32
      %p36 = pneg %p30
      %p37 = scmp.eq.s32.totalorder %s21, 1
      %p38 = por %p36, %p37
      %p39 = scmp.ne.s32.totalorder %s31, %s34
      %p40 = scmp.eq.s32.totalorder %s21, 0
      %p41 = por %p39, %p40
      %p42 = scmp.ne.s32.totalorder %s31, %s34
      %p43 = scmp.eq.s32.totalorder %s26, 1
      %p44 = por %p42, %p43
      %p45 = scmp.ne.s32.totalorder %s34, %s35
      %p46 = scmp.eq.s32.totalorder %s26, 0
      %p47 = por %p45, %p46
      %p48 = scmp.ne.s32.totalorder %s34, %s35
      %p49 = scmp.eq.s32.totalorder %s27, 1
      %p50 = por %p48, %p49
      %p52 = scmp.ne.s32.totalorder %s35, %s51
      %p53 = scmp.eq.s32.totalorder %s27, 0
      %p54 = por %p52, %p53
      %s56 = sadd.s32 %s55, 1
      %p59 = scmp.eq.s32.totalorder %s21, 1
      %p60 = scmp.ne.s32.totalorder %s55, %s57
      %p61 = scmp.eq.s32.totalorder %s21, 0
      %p62 = por %p60, %p61
      %p63 = scmp.ne.s32.totalorder %s55, %s57
      %p64 = scmp.eq.s32.totalorder %s26, 1
      %p65 = por %p63, %p64
      %p66 = scmp.ne.s32.totalorder %s57, %s58
      %p67 = scmp.eq.s32.totalorder %s26, 0
      %p68 = por %p66, %p67
      %p69 = scmp.ne.s32.totalorder %s57, %s58
      %p70 = scmp.eq.s32.totalorder %s27, 1
      %p71 = por %p69, %p70
      %p73 = scmp.ne.s32.totalorder %s58, %s72
      %p74 = scmp.eq.s32.totalorder %s27, 0
      %p75 = por %p73, %p74
      %s77 = sadd.s32 %s76, 1
      %p80 = scmp.eq.s32.totalorder %s21, 1
      %p81 = scmp.ne.s32.totalorder %s76, %s78
      %p82 = scmp.eq.s32.totalorder %s21, 0
      %p83 = por %p81, %p82
      %p84 = scmp.ne.s32.totalorder %s76, %s78
      %p85 = scmp.eq.s32.totalorder %s26, 1
      %p86 = por %p84, %p85
      %p87 = scmp.ne.s32.totalorder %s78, %s79
      %p88 = scmp.eq.s32.totalorder %s26, 0
      %p89 = por %p87, %p88
      %p90 = scmp.ne.s32.totalorder %s78, %s79
      %p91 = scmp.eq.s32.totalorder %s27, 1
      %p92 = por %p90, %p91
      %p94 = scmp.ne.s32.totalorder %s79, %s93
      %p95 = scmp.eq.s32.totalorder %s27, 0
      %p96 = por %p94, %p95
      %s98 = sadd.s32 %s97, 1
      %p101 = scmp.eq.s32.totalorder %s21, 1
      %p102 = scmp.ne.s32.totalorder %s97, %s99
      %p103 = scmp.eq.s32.totalorder %s21, 0
      %p104 = por %p102, %p103
      %p105 = scmp.ne.s32.totalorder %s97, %s99
      %p106 = scmp.eq.s32.totalorder %s26, 1
      %p107 = por %p105, %p106
      %p108 = scmp.ne.s32.totalorder %s99, %s100
      %p109 = scmp.eq.s32.totalorder %s26, 0
      %p110 = por %p108, %p109
      %p111 = scmp.ne.s32.totalorder %s99, %s100
      %p112 = scmp.eq.s32.totalorder %s27, 1
      %p113 = por %p111, %p112
      %p115 = scmp.ne.s32.totalorder %s100, %s114
      %p116 = scmp.eq.s32.totalorder %s27, 0
      %p117 = por %p115, %p116
      %s119 = sadd.s32 %s118, 1
      %p122 = scmp.eq.s32.totalorder %s21, 1
      %p123 = scmp.ne.s32.totalorder %s118, %s120
      %p124 = scmp.eq.s32.totalorder %s21, 0
      %p125 = por %p123, %p124
      %p126 = scmp.ne.s32.totalorder %s118, %s120
      %p127 = scmp.eq.s32.totalorder %s26, 1
      %p128 = por %p126, %p127
      %p129 = scmp.ne.s32.totalorder %s120, %s121
      %p130 = scmp.eq.s32.totalorder %s26, 0
      %p131 = por %p129, %p130
      %p132 = scmp.ne.s32.totalorder %s120, %s121
      %p133 = scmp.eq.s32.totalorder %s27, 1
      %p134 = por %p132, %p133
      %p136 = scmp.ne.s32.totalorder %s121, %s135
      %p137 = scmp.eq.s32.totalorder %s27, 0
      %p138 = por %p136, %p137
      %s140 = sadd.s32 %s139, 1
      %p143 = scmp.eq.s32.totalorder %s21, 1
      %p144 = scmp.ne.s32.totalorder %s139, %s141
      %p145 = scmp.eq.s32.totalorder %s21, 0
      %p146 = por %p144, %p145
      %p147 = scmp.ne.s32.totalorder %s139, %s141
      %p148 = scmp.eq.s32.totalorder %s26, 1
      %p149 = por %p147, %p148
      %p150 = scmp.ne.s32.totalorder %s141, %s142
      %p151 = scmp.eq.s32.totalorder %s26, 0
      %p152 = por %p150, %p151
      %p153 = scmp.ne.s32.totalorder %s141, %s142
      %p154 = scmp.eq.s32.totalorder %s27, 1
      %p155 = por %p153, %p154
      %p157 = scmp.ne.s32.totalorder %s142, %s156
      %p158 = scmp.eq.s32.totalorder %s27, 0
      %p159 = por %p157, %p158
      %s161 = sadd.s32 %s160, 1
      %p164 = scmp.eq.s32.totalorder %s21, 1
      %p165 = scmp.ne.s32.totalorder %s160, %s162
      %p166 = scmp.eq.s32.totalorder %s21, 0
      %p167 = por %p165, %p166
      %p168 = scmp.ne.s32.totalorder %s160, %s162
      %p169 = scmp.eq.s32.totalorder %s26, 1
      %p170 = por %p168, %p169
      %p171 = scmp.ne.s32.totalorder %s162, %s163
      %p172 = scmp.eq.s32.totalorder %s26, 0
      %p173 = por %p171, %p172
      %p174 = scmp.ne.s32.totalorder %s162, %s163
      %p175 = scmp.eq.s32.totalorder %s27, 1
      %p176 = por %p174, %p175
      %p178 = scmp.ne.s32.totalorder %s163, %s177
      %p179 = scmp.eq.s32.totalorder %s27, 0
      %p180 = por %p178, %p179
      %s181 = ssub.s32 %s21, %s28
      %p182 = scmp.eq.s32.totalorder %s181, 0
      %s184 = sadd.s32 %s183, 1
      %s185 = scalar_select %p182, %s183, %s184
      %p188 = pneg %p182
      %p189 = scmp.eq.s32.totalorder %s21, 1
      %p190 = por %p188, %p189
      %p191 = scmp.ne.s32.totalorder %s183, %s186
      %p192 = scmp.eq.s32.totalorder %s21, 0
      %p193 = por %p191, %p192
      %p194 = scmp.ne.s32.totalorder %s183, %s186
      %p195 = scmp.eq.s32.totalorder %s26, 1
      %p196 = por %p194, %p195
      %p197 = scmp.ne.s32.totalorder %s186, %s187
      %p198 = scmp.eq.s32.totalorder %s26, 0
      %p199 = por %p197, %p198
      %p200 = scmp.ne.s32.totalorder %s186, %s187
      %p201 = scmp.eq.s32.totalorder %s27, 1
      %p202 = por %p200, %p201
      %p204 = scmp.ne.s32.totalorder %s187, %s203
      %p205 = scmp.eq.s32.totalorder %s27, 0
      %p206 = por %p204, %p205
      %p207 = scmp.le.s32.totalorder 1, %s21
      %p208 = scmp.lt.s32.totalorder %s21, 3
      %p209 = pnand %p207, %p208
      %p210 = pneg %p209
      // Predicated region
      $region9: #{tpu_custom_call.1} parent=5 // pred_check
        _
      $region10: #{tpu_custom_call.1} parent=5 // pred_check_branch
        %212 = sbr.rel (%p209) target = $region12
      $region11: #{tpu_custom_call.1} parent=5 // pred_region
        %s213 = ssub.s32 %s21, 1
        // Predicated region
        $region13: #{tpu_custom_call.1} parent=11 // pred_check
          %p214 = pneg %p68
        $region14: #{tpu_custom_call.1} parent=11 // pred_check_branch
          %216 = sbr.rel (%p214) target = $region16
        $region15: #{tpu_custom_call.1} parent=11 // pred_region
          %s218 = ssub.s32 2048, 2048
          %219 = vsyncadd [#allocation6], %s218
          %s220 = sshll.u32 [#allocation5], 4
          %s221 = int_to_ptr.vmem [resolvable:$true] %s220
          %226 = dma.hbm_to_vmem [thread:$0]  %s1, 2048, %s221, [#allocation6], 128, 128, 8
        $region16: #{tpu_custom_call.1} parent=11 // pred_fallthru
          _
        // Predicated region
        $region17: #{tpu_custom_call.1} parent=11 // pred_check
          %p227 = pneg %p89
        $region18: #{tpu_custom_call.1} parent=11 // pred_check_branch
          %229 = sbr.rel (%p227) target = $region20
        $region19: #{tpu_custom_call.1} parent=11 // pred_region
          _
        $region20: #{tpu_custom_call.1} parent=11 // pred_fallthru
          _
        // Predicated region
        $region21: #{tpu_custom_call.1} parent=11 // pred_check
          %p230 = pneg %p110
        $region22: #{tpu_custom_call.1} parent=11 // pred_check_branch
          %232 = sbr.rel (%p230) target = $region24
        $region23: #{tpu_custom_call.1} parent=11 // pred_region
          %s234 = ssub.s32 4096, 4096
          %235 = vsyncadd [#allocation6], %s234
          %s236 = sshll.u32 [#allocation7], 4
          %s237 = int_to_ptr.vmem [resolvable:$true] %s236
          %242 = dma.hbm_to_vmem [thread:$0]  %s3, 4096, %s237, [#allocation6], 128, 128, 8
        $region24: #{tpu_custom_call.1} parent=11 // pred_fallthru
          _
        // Predicated region
        $region25: #{tpu_custom_call.1} parent=11 // pred_check
          %p243 = pneg %p131
        $region26: #{tpu_custom_call.1} parent=11 // pred_check_branch
          %245 = sbr.rel (%p243) target = $region28
        $region27: #{tpu_custom_call.1} parent=11 // pred_region
          _
        $region28: #{tpu_custom_call.1} parent=11 // pred_fallthru
          _
        // Predicated region
        $region29: #{tpu_custom_call.1} parent=11 // pred_check
          %p246 = pneg %p152
        $region30: #{tpu_custom_call.1} parent=11 // pred_check_branch
          %248 = sbr.rel (%p246) target = $region32
        $region31: #{tpu_custom_call.1} parent=11 // pred_region
          %s250 = ssub.s32 2048, 2048
          %251 = vsyncadd [#allocation9], %s250
          %s252 = sshll.u32 [#allocation8], 4
          %s253 = int_to_ptr.vmem [resolvable:$true] %s252
          %258 = dma.hbm_to_vmem [thread:$0]  %s5, 2048, %s253, [#allocation9], 64, 64, 4
        $region32: #{tpu_custom_call.1} parent=11 // pred_fallthru
          _
        // Predicated region
        $region33: #{tpu_custom_call.1} parent=11 // pred_check
          %p259 = pneg %p173
        $region34: #{tpu_custom_call.1} parent=11 // pred_check_branch
          %261 = sbr.rel (%p259) target = $region36
        $region35: #{tpu_custom_call.1} parent=11 // pred_region
          _
        $region36: #{tpu_custom_call.1} parent=11 // pred_fallthru
          _
      $region12: #{tpu_custom_call.1} parent=5 // pred_fallthru
        _
      %p262 = scmp.lt.s32.totalorder %s21, 2
      // Predicated region
      $region37: #{tpu_custom_call.1} parent=5 // pred_check
        %p263 = pneg %p262
      $region38: #{tpu_custom_call.1} parent=5 // pred_check_branch
        %265 = sbr.rel (%p263) target = $region40
      $region39: #{tpu_custom_call.1} parent=5 // pred_region
        // Predicated region
        $region41: #{tpu_custom_call.1} parent=39 // pred_check
          %p266 = pneg %p41
        $region42: #{tpu_custom_call.1} parent=39 // pred_check_branch
          %268 = sbr.rel (%p266) target = $region44
        $region43: #{tpu_custom_call.1} parent=39 // pred_region
          %s269 = sand.u32 %s31, 1
          %s270 = scalar_lea.sflag [#allocation3], %s269
          %s271 = sand.u32 %s31, 1
          %s272 = smul.addr %s271, 8
          %s273 = scalar_lea.vmem [#allocation2], %s272
          %s274 = smul.u32 2, %s21
          %s276 = ssub.s32 128, 128
          %277 = vsyncadd %s270, %s276
          %s278 = smul.addr %s274, 64
          %s279 = scalar_lea.hbm %s0, %s278
          %s280 = sshll.u32 %s273, 4
          %s281 = int_to_ptr.vmem [resolvable:$true] %s280
          %286 = dma.hbm_to_vmem [thread:$0]  %s279, 128, %s281, %s270, 64, 64, 4
        $region44: #{tpu_custom_call.1} parent=39 // pred_fallthru
          _
      $region40: #{tpu_custom_call.1} parent=5 // pred_fallthru
        _
      %p287 = scmp.le.s32.totalorder 1, %s21
      %p288 = scmp.lt.s32.totalorder %s21, 3
      %p289 = pnand %p287, %p288
      %p290 = pneg %p289
      // Predicated region
      $region45: #{tpu_custom_call.1} parent=5 // pred_check
        _
      $region46: #{tpu_custom_call.1} parent=5 // pred_check_branch
        %292 = sbr.rel (%p289) target = $region48
      $region47: #{tpu_custom_call.1} parent=5 // pred_region
        %s293 = ssub.s32 %s21, 1
        %s294 = sand.u32 %s34, 1
        %s295 = scalar_lea.sflag [#allocation3], %s294
        %s296 = sand.u32 %s34, 1
        %s297 = smul.addr %s296, 8
        %s298 = scalar_lea.vmem [#allocation2], %s297
        // Predicated region
        $region49: #{tpu_custom_call.1} parent=47 // pred_check
          %p299 = pneg %p47
        $region50: #{tpu_custom_call.1} parent=47 // pred_check_branch
          %301 = sbr.rel (%p299) target = $region52
        $region51: #{tpu_custom_call.1} parent=47 // pred_region
          %302 = dma.done %s295, 128
        $region52: #{tpu_custom_call.1} parent=47 // pred_fallthru
          _
        // Predicated region
        $region53: #{tpu_custom_call.1} parent=47 // pred_check
          %p303 = pneg %p68
        $region54: #{tpu_custom_call.1} parent=47 // pred_check_branch
          %305 = sbr.rel (%p303) target = $region56
        $region55: #{tpu_custom_call.1} parent=47 // pred_region
          %306 = dma.done [#allocation6], 2048
        $region56: #{tpu_custom_call.1} parent=47 // pred_fallthru
          _
        // Predicated region
        $region57: #{tpu_custom_call.1} parent=47 // pred_check
          %p307 = pneg %p110
        $region58: #{tpu_custom_call.1} parent=47 // pred_check_branch
          %309 = sbr.rel (%p307) target = $region60
        $region59: #{tpu_custom_call.1} parent=47 // pred_region
          %310 = dma.done [#allocation6], 4096
        $region60: #{tpu_custom_call.1} parent=47 // pred_fallthru
          _
        // Predicated region
        $region61: #{tpu_custom_call.1} parent=47 // pred_check
          %p311 = pneg %p152
        $region62: #{tpu_custom_call.1} parent=47 // pred_check_branch
          %313 = sbr.rel (%p311) target = $region64
        $region63: #{tpu_custom_call.1} parent=47 // pred_region
          %314 = dma.done [#allocation9], 2048
        $region64: #{tpu_custom_call.1} parent=47 // pred_fallthru
          _
        %s315 = sand.u32 %s34, 1
        %s316 = scalar_lea.sflag [#allocation3], %s315
        %s317 = sand.u32 %s34, 1
        %s318 = smul.addr %s317, 8
        %s319 = scalar_lea.vmem [#allocation2], %s318
        %p320 = pneg %p47
        %p321 = pneg %p44
        %p322 = pneg %p68
        %p323 = pneg %p65
        %p324 = pneg %p89
        %p325 = pneg %p86
        %p326 = pneg %p110
        %p327 = pneg %p107
        %p328 = pneg %p131
        %p329 = pneg %p128
        %p330 = pneg %p152
        %p331 = pneg %p149
        %p332 = pneg %p173
        %p333 = pneg %p170
        %p334 = pneg %p199
        %p335 = pneg %p196
        %s336 = sand.u32 %s186, 1
        %s337 = scalar_lea.sflag [#allocation4], %s336
        %s338 = sand.u32 %s186, 1
        %s339 = smul.addr %s338, 16
        %s340 = scalar_lea.vmem [#allocation10], %s339
        %s341 = smul.u32 2, %s26
        %s342 = smul.u32 2, %s26
        %v344 = vld [vmem:[%s298] sm:$0xf]
        %v345 = vld [vmem:[%s298 + $0x4] sm:$0xf]
        %v346 = vld [vmem:[#allocation5] sm:$0xff]
        %v347 = vld [vmem:[#allocation5 + $0x8] sm:$0xff]
        %v348 = vld [vmem:[#allocation5 + $0x10] sm:$0xff]
        %v349 = vld [vmem:[#allocation5 + $0x18] sm:$0xff]
        %v350 = vld [vmem:[#allocation5 + $0x20] sm:$0xff]
        %v351 = vld [vmem:[#allocation5 + $0x28] sm:$0xff]
        %v352 = vld [vmem:[#allocation5 + $0x30] sm:$0xff]
        %v353 = vld [vmem:[#allocation5 + $0x38] sm:$0xff]
        %v354 = vld [vmem:[#allocation5 + $0x40] sm:$0xff]
        %v355 = vld [vmem:[#allocation5 + $0x48] sm:$0xff]
        %v356 = vld [vmem:[#allocation5 + $0x50] sm:$0xff]
        %v357 = vld [vmem:[#allocation5 + $0x58] sm:$0xff]
        %v358 = vld [vmem:[#allocation5 + $0x60] sm:$0xff]
        %v359 = vld [vmem:[#allocation5 + $0x68] sm:$0xff]
        %v360 = vld [vmem:[#allocation5 + $0x70] sm:$0xff]
        %v361 = vld [vmem:[#allocation5 + $0x78] sm:$0xff]
        %v362 = vld [vmem:[%s2] sm:$0x3]
        %v364 = vlaneseq
        %v365 = vshrl.u32 %v364, 7
        %v366 = vsub.s32 0, %v365
        %v367 = vrot.slane %v362, %v366
        %v368 = vlaneseq
        %v369 = vshrl.u32 %v368, 7
        %v370 = vsub.s32 1, %v369
        %v371 = vrot.slane %v362, %v370
        %v376 = vunpack.c.l.b16 %v344
        %v377 = vunpack.c.l.b16 %v345
        %v378 = vpack.c.b16 %v377, %v376
        %v396 = vunpack.c.l.b16 %v346
        %v397 = vunpack.c.h.b16 %v346
        %v398 = vunpack.c.l.b16 %v347
        %v399 = vunpack.c.h.b16 %v347
        %v400 = vunpack.c.l.b16 %v348
        %v401 = vunpack.c.h.b16 %v348
        %v402 = vunpack.c.l.b16 %v349
        %v403 = vunpack.c.h.b16 %v349
        %v404 = vunpack.c.l.b16 %v350
        %v405 = vunpack.c.h.b16 %v350
        %v406 = vunpack.c.l.b16 %v351
        %v407 = vunpack.c.h.b16 %v351
        %v408 = vunpack.c.l.b16 %v352
        %v409 = vunpack.c.h.b16 %v352
        %v410 = vunpack.c.l.b16 %v353
        %v411 = vunpack.c.h.b16 %v353
        %v412 = vunpack.c.l.b16 %v354
        %v413 = vunpack.c.h.b16 %v354
        %v414 = vunpack.c.l.b16 %v355
        %v415 = vunpack.c.h.b16 %v355
        %v416 = vunpack.c.l.b16 %v356
        %v417 = vunpack.c.h.b16 %v356
        %v418 = vunpack.c.l.b16 %v357
        %v419 = vunpack.c.h.b16 %v357
        %v420 = vunpack.c.l.b16 %v358
        %v421 = vunpack.c.h.b16 %v358
        %v422 = vunpack.c.l.b16 %v359
        %v423 = vunpack.c.h.b16 %v359
        %v424 = vunpack.c.l.b16 %v360
        %v425 = vunpack.c.h.b16 %v360
        %v426 = vunpack.c.l.b16 %v361
        %v427 = vunpack.c.h.b16 %v361
        %v428 = vpack.c.b16 %v398, %v396
        %v429 = vpack.c.b16 %v399, %v397
        %v430 = vpack.c.b16 %v402, %v400
        %v431 = vpack.c.b16 %v403, %v401
        %v432 = vpack.c.b16 %v406, %v404
        %v433 = vpack.c.b16 %v407, %v405
        %v434 = vpack.c.b16 %v410, %v408
        %v435 = vpack.c.b16 %v411, %v409
        %v436 = vpack.c.b16 %v414, %v412
        %v437 = vpack.c.b16 %v415, %v413
        %v438 = vpack.c.b16 %v418, %v416
        %v439 = vpack.c.b16 %v419, %v417
        %v440 = vpack.c.b16 %v422, %v420
        %v441 = vpack.c.b16 %v423, %v421
        %v442 = vpack.c.b16 %v426, %v424
        %v443 = vpack.c.b16 %v427, %v425
        %460 = vmatprep.subr.bf16.mxu0 %v443
        %461 = vmatpush1.bf16.msra.mxu0 %v442
        %462 = vmatprep.subr.bf16.mxu0 %v441
        %463 = vmatpush1.bf16.msra.mxu0 %v440
        %464 = vmatprep.subr.bf16.mxu0 %v439
        %465 = vmatpush1.bf16.msra.mxu0 %v438
        %466 = vmatprep.subr.bf16.mxu0 %v437
        %467 = vmatpush1.bf16.msra.mxu0 %v436
        %468 = vmatprep.subr.bf16.mxu0 %v435
        %469 = vmatpush1.bf16.msra.mxu0 %v434
        %470 = vmatprep.subr.bf16.mxu0 %v433
        %471 = vmatpush1.bf16.msra.mxu0 %v432
        %472 = vmatprep.subr.bf16.mxu0 %v431
        %473 = vmatpush1.bf16.msra.mxu0 %v430
        %474 = vmatprep.subr.bf16.mxu0 %v429
        %475 = vmatpush1.bf16.msra.mxu0 %v428
        %476 = vmatprep.subr.bf16.mxu0 0
        %477 = vmatpush2.bf16.msra.mxu0 0
        %478 = vmatprep.subr.bf16.mxu0 0
        %479 = vmatpush2.bf16.msra.mxu0 0
        %480 = vmatprep.subr.bf16.mxu0 0
        %481 = vmatpush2.bf16.msra.mxu0 0
        %482 = vmatprep.subr.bf16.mxu0 0
        %483 = vmatpush2.bf16.msra.mxu0 0
        %484 = vmatprep.subr.bf16.mxu0 0
        %485 = vmatpush2.bf16.msra.mxu0 0
        %486 = vmatprep.subr.bf16.mxu0 0
        %487 = vmatpush2.bf16.msra.mxu0 0
        %488 = vmatprep.subr.bf16.mxu0 0
        %489 = vmatpush2.bf16.msra.mxu0 0
        %490 = vmatprep.subr.bf16.mxu0 0
        %491 = vmatpush2.bf16.msra.mxu0 0
        %492 = vmatprep.mubr.bf16.mxu0 0
        %493 = vmatmul.mubr.bf16.gmra.mxu0 %v378
        %v494 = vpop.f32.mrf.mxu0
        %v495 = vadd.f32 %v367, %v494
        %v496 = vpop.f32.mrf.mxu0
        %v497 = vadd.f32 %v371, %v496
        %v498 = vpop.f32.mrf.mxu0
        %v499 = vadd.f32 %v367, %v498
        %v500 = vpop.f32.mrf.mxu0
        %v501 = vadd.f32 %v371, %v500
        %502 = vdwg.mxu0
        %v503 = vmax.f32 %v495, 0.0
        %v504 = vmax.f32 %v497, 0.0
        %v505 = vmax.f32 %v499, 0.0
        %v506 = vmax.f32 %v501, 0.0
        %v507 = vpack.c.bf16 %v505, %v503
        %v508 = vpack.c.bf16 %v506, %v504
        %v509 = vld [vmem:[#allocation7] sm:$0xff]
        %v510 = vld [vmem:[#allocation7 + $0x8] sm:$0xff]
        %v511 = vld [vmem:[#allocation7 + $0x10] sm:$0xff]
        %v512 = vld [vmem:[#allocation7 + $0x18] sm:$0xff]
        %v513 = vld [vmem:[#allocation7 + $0x20] sm:$0xff]
        %v514 = vld [vmem:[#allocation7 + $0x28] sm:$0xff]
        %v515 = vld [vmem:[#allocation7 + $0x30] sm:$0xff]
        %v516 = vld [vmem:[#allocation7 + $0x38] sm:$0xff]
        %v517 = vld [vmem:[#allocation7 + $0x40] sm:$0xff]
        %v518 = vld [vmem:[#allocation7 + $0x48] sm:$0xff]
        %v519 = vld [vmem:[#allocation7 + $0x50] sm:$0xff]
        %v520 = vld [vmem:[#allocation7 + $0x58] sm:$0xff]
        %v521 = vld [vmem:[#allocation7 + $0x60] sm:$0xff]
        %v522 = vld [vmem:[#allocation7 + $0x68] sm:$0xff]
        %v523 = vld [vmem:[#allocation7 + $0x70] sm:$0xff]
        %v524 = vld [vmem:[#allocation7 + $0x78] sm:$0xff]
        %v525 = vld [vmem:[#allocation7 + $0x80] sm:$0xff]
        %v526 = vld [vmem:[#allocation7 + $0x88] sm:$0xff]
        %v527 = vld [vmem:[#allocation7 + $0x90] sm:$0xff]
        %v528 = vld [vmem:[#allocation7 + $0x98] sm:$0xff]
        %v529 = vld [vmem:[#allocation7 + $0xa0] sm:$0xff]
        %v530 = vld [vmem:[#allocation7 + $0xa8] sm:$0xff]
        %v531 = vld [vmem:[#allocation7 + $0xb0] sm:$0xff]
        %v532 = vld [vmem:[#allocation7 + $0xb8] sm:$0xff]
        %v533 = vld [vmem:[#allocation7 + $0xc0] sm:$0xff]
        %v534 = vld [vmem:[#allocation7 + $0xc8] sm:$0xff]
        %v535 = vld [vmem:[#allocation7 + $0xd0] sm:$0xff]
        %v536 = vld [vmem:[#allocation7 + $0xd8] sm:$0xff]
        %v537 = vld [vmem:[#allocation7 + $0xe0] sm:$0xff]
        %v538 = vld [vmem:[#allocation7 + $0xe8] sm:$0xff]
        %v539 = vld [vmem:[#allocation7 + $0xf0] sm:$0xff]
        %v540 = vld [vmem:[#allocation7 + $0xf8] sm:$0xff]
        %v541 = vld [vmem:[%s4] sm:$0x3]
        %v543 = vlaneseq
        %v544 = vshrl.u32 %v543, 7
        %v545 = vsub.s32 0, %v544
        %v546 = vrot.slane %v541, %v545
        %v547 = vlaneseq
        %v548 = vshrl.u32 %v547, 7
        %v549 = vsub.s32 1, %v548
        %v550 = vrot.slane %v541, %v549
        %v585 = vunpack.c.l.b16 %v509
        %v586 = vunpack.c.h.b16 %v509
        %v587 = vunpack.c.l.b16 %v510
        %v588 = vunpack.c.h.b16 %v510
        %v589 = vunpack.c.l.b16 %v511
        %v590 = vunpack.c.h.b16 %v511
        %v591 = vunpack.c.l.b16 %v512
        %v592 = vunpack.c.h.b16 %v512
        %v593 = vunpack.c.l.b16 %v513
        %v594 = vunpack.c.h.b16 %v513
        %v595 = vunpack.c.l.b16 %v514
        %v596 = vunpack.c.h.b16 %v514
        %v597 = vunpack.c.l.b16 %v515
        %v598 = vunpack.c.h.b16 %v515
        %v599 = vunpack.c.l.b16 %v516
        %v600 = vunpack.c.h.b16 %v516
        %v601 = vunpack.c.l.b16 %v517
        %v602 = vunpack.c.h.b16 %v517
        %v603 = vunpack.c.l.b16 %v518
        %v604 = vunpack.c.h.b16 %v518
        %v605 = vunpack.c.l.b16 %v519
        %v606 = vunpack.c.h.b16 %v519
        %v607 = vunpack.c.l.b16 %v520
        %v608 = vunpack.c.h.b16 %v520
        %v609 = vunpack.c.l.b16 %v521
        %v610 = vunpack.c.h.b16 %v521
        %v611 = vunpack.c.l.b16 %v522
        %v612 = vunpack.c.h.b16 %v522
        %v613 = vunpack.c.l.b16 %v523
        %v614 = vunpack.c.h.b16 %v523
        %v615 = vunpack.c.l.b16 %v524
        %v616 = vunpack.c.h.b16 %v524
        %v617 = vunpack.c.l.b16 %v525
        %v618 = vunpack.c.h.b16 %v525
        %v619 = vunpack.c.l.b16 %v526
        %v620 = vunpack.c.h.b16 %v526
        %v621 = vunpack.c.l.b16 %v527
        %v622 = vunpack.c.h.b16 %v527
        %v623 = vunpack.c.l.b16 %v528
        %v624 = vunpack.c.h.b16 %v528
        %v625 = vunpack.c.l.b16 %v529
        %v626 = vunpack.c.h.b16 %v529
        %v627 = vunpack.c.l.b16 %v530
        %v628 = vunpack.c.h.b16 %v530
        %v629 = vunpack.c.l.b16 %v531
        %v630 = vunpack.c.h.b16 %v531
        %v631 = vunpack.c.l.b16 %v532
        %v632 = vunpack.c.h.b16 %v532
        %v633 = vunpack.c.l.b16 %v533
        %v634 = vunpack.c.h.b16 %v533
        %v635 = vunpack.c.l.b16 %v534
        %v636 = vunpack.c.h.b16 %v534
        %v637 = vunpack.c.l.b16 %v535
        %v638 = vunpack.c.h.b16 %v535
        %v639 = vunpack.c.l.b16 %v536
        %v640 = vunpack.c.h.b16 %v536
        %v641 = vunpack.c.l.b16 %v537
        %v642 = vunpack.c.h.b16 %v537
        %v643 = vunpack.c.l.b16 %v538
        %v644 = vunpack.c.h.b16 %v538
        %v645 = vunpack.c.l.b16 %v539
        %v646 = vunpack.c.h.b16 %v539
        %v647 = vunpack.c.l.b16 %v540
        %v648 = vunpack.c.h.b16 %v540
        %v649 = vpack.c.b16 %v587, %v585
        %v650 = vpack.c.b16 %v588, %v586
        %v651 = vpack.c.b16 %v591, %v589
        %v652 = vpack.c.b16 %v592, %v590
        %v653 = vpack.c.b16 %v595, %v593
        %v654 = vpack.c.b16 %v596, %v594
        %v655 = vpack.c.b16 %v599, %v597
        %v656 = vpack.c.b16 %v600, %v598
        %v657 = vpack.c.b16 %v603, %v601
        %v658 = vpack.c.b16 %v604, %v602
        %v659 = vpack.c.b16 %v607, %v605
        %v660 = vpack.c.b16 %v608, %v606
        %v661 = vpack.c.b16 %v611, %v609
        %v662 = vpack.c.b16 %v612, %v610
        %v663 = vpack.c.b16 %v615, %v613
        %v664 = vpack.c.b16 %v616, %v614
        %v665 = vpack.c.b16 %v619, %v617
        %v666 = vpack.c.b16 %v620, %v618
        %v667 = vpack.c.b16 %v623, %v621
        %v668 = vpack.c.b16 %v624, %v622
        %v669 = vpack.c.b16 %v627, %v625
        %v670 = vpack.c.b16 %v628, %v626
        %v671 = vpack.c.b16 %v631, %v629
        %v672 = vpack.c.b16 %v632, %v630
        %v673 = vpack.c.b16 %v635, %v633
        %v674 = vpack.c.b16 %v636, %v634
        %v675 = vpack.c.b16 %v639, %v637
        %v676 = vpack.c.b16 %v640, %v638
        %v677 = vpack.c.b16 %v643, %v641
        %v678 = vpack.c.b16 %v644, %v642
        %v679 = vpack.c.b16 %v647, %v645
        %v680 = vpack.c.b16 %v648, %v646
        %713 = vmatprep.subr.bf16.mxu0 %v664
        %714 = vmatpush1.bf16.msra.mxu0 %v663
        %715 = vmatprep.subr.bf16.mxu0 %v662
        %716 = vmatpush1.bf16.msra.mxu0 %v661
        %717 = vmatprep.subr.bf16.mxu0 %v660
        %718 = vmatpush1.bf16.msra.mxu0 %v659
        %719 = vmatprep.subr.bf16.mxu0 %v658
        %720 = vmatpush1.bf16.msra.mxu0 %v657
        %721 = vmatprep.subr.bf16.mxu0 %v656
        %722 = vmatpush1.bf16.msra.mxu0 %v655
        %723 = vmatprep.subr.bf16.mxu0 %v654
        %724 = vmatpush1.bf16.msra.mxu0 %v653
        %725 = vmatprep.subr.bf16.mxu0 %v652
        %726 = vmatpush1.bf16.msra.mxu0 %v651
        %727 = vmatprep.subr.bf16.mxu0 %v650
        %728 = vmatpush1.bf16.msra.mxu0 %v649
        %729 = vmatprep.subr.bf16.mxu0 %v680
        %730 = vmatpush2.bf16.msra.mxu0 %v679
        %731 = vmatprep.subr.bf16.mxu0 %v678
        %732 = vmatpush2.bf16.msra.mxu0 %v677
        %733 = vmatprep.subr.bf16.mxu0 %v676
        %734 = vmatpush2.bf16.msra.mxu0 %v675
        %735 = vmatprep.subr.bf16.mxu0 %v674
        %736 = vmatpush2.bf16.msra.mxu0 %v673
        %737 = vmatprep.subr.bf16.mxu0 %v672
        %738 = vmatpush2.bf16.msra.mxu0 %v671
        %739 = vmatprep.subr.bf16.mxu0 %v670
        %740 = vmatpush2.bf16.msra.mxu0 %v669
        %741 = vmatprep.subr.bf16.mxu0 %v668
        %742 = vmatpush2.bf16.msra.mxu0 %v667
        %743 = vmatprep.subr.bf16.mxu0 %v666
        %744 = vmatpush2.bf16.msra.mxu0 %v665
        %745 = vmatprep.mubr.bf16.mxu0 %v508
        %746 = vmatmul.mubr.bf16.gmra.mxu0 %v507
        %v747 = vpop.f32.mrf.mxu0
        %v748 = vadd.f32 %v546, %v747
        %v749 = vpop.f32.mrf.mxu0
        %v750 = vadd.f32 %v550, %v749
        %v751 = vpop.f32.mrf.mxu0
        %v752 = vadd.f32 %v546, %v751
        %v753 = vpop.f32.mrf.mxu0
        %v754 = vadd.f32 %v550, %v753
        %755 = vdwg.mxu0
        %v756 = vmax.f32 %v748, 0.0
        %v757 = vmax.f32 %v750, 0.0
        %v758 = vmax.f32 %v752, 0.0
        %v759 = vmax.f32 %v754, 0.0
        %v760 = vpack.c.bf16 %v758, %v756
        %v761 = vpack.c.bf16 %v759, %v757
        %v762 = vld [vmem:[#allocation8] sm:$0xf]
        %v763 = vld [vmem:[#allocation8 + $0x4] sm:$0xf]
        %v764 = vld [vmem:[#allocation8 + $0x8] sm:$0xf]
        %v765 = vld [vmem:[#allocation8 + $0xc] sm:$0xf]
        %v766 = vld [vmem:[#allocation8 + $0x10] sm:$0xf]
        %v767 = vld [vmem:[#allocation8 + $0x14] sm:$0xf]
        %v768 = vld [vmem:[#allocation8 + $0x18] sm:$0xf]
        %v769 = vld [vmem:[#allocation8 + $0x1c] sm:$0xf]
        %v770 = vld [vmem:[#allocation8 + $0x20] sm:$0xf]
        %v771 = vld [vmem:[#allocation8 + $0x24] sm:$0xf]
        %v772 = vld [vmem:[#allocation8 + $0x28] sm:$0xf]
        %v773 = vld [vmem:[#allocation8 + $0x2c] sm:$0xf]
        %v774 = vld [vmem:[#allocation8 + $0x30] sm:$0xf]
        %v775 = vld [vmem:[#allocation8 + $0x34] sm:$0xf]
        %v776 = vld [vmem:[#allocation8 + $0x38] sm:$0xf]
        %v777 = vld [vmem:[#allocation8 + $0x3c] sm:$0xf]
        %v778 = vld [vmem:[#allocation8 + $0x40] sm:$0xf]
        %v779 = vld [vmem:[#allocation8 + $0x44] sm:$0xf]
        %v780 = vld [vmem:[#allocation8 + $0x48] sm:$0xf]
        %v781 = vld [vmem:[#allocation8 + $0x4c] sm:$0xf]
        %v782 = vld [vmem:[#allocation8 + $0x50] sm:$0xf]
        %v783 = vld [vmem:[#allocation8 + $0x54] sm:$0xf]
        %v784 = vld [vmem:[#allocation8 + $0x58] sm:$0xf]
        %v785 = vld [vmem:[#allocation8 + $0x5c] sm:$0xf]
        %v786 = vld [vmem:[#allocation8 + $0x60] sm:$0xf]
        %v787 = vld [vmem:[#allocation8 + $0x64] sm:$0xf]
        %v788 = vld [vmem:[#allocation8 + $0x68] sm:$0xf]
        %v789 = vld [vmem:[#allocation8 + $0x6c] sm:$0xf]
        %v790 = vld [vmem:[#allocation8 + $0x70] sm:$0xf]
        %v791 = vld [vmem:[#allocation8 + $0x74] sm:$0xf]
        %v792 = vld [vmem:[#allocation8 + $0x78] sm:$0xf]
        %v793 = vld [vmem:[#allocation8 + $0x7c] sm:$0xf]
        %v794 = vld [vmem:[%s6] sm:$0x1]
        %v796 = vlaneseq
        %v797 = vshrl.u32 %v796, 7
        %v798 = vsub.s32 0, %v797
        %v799 = vrot.slane %v794, %v798
        %v833 = vunpack.c.l.b16 %v762
        %v834 = vunpack.c.l.b16 %v763
        %v835 = vunpack.c.l.b16 %v764
        %v836 = vunpack.c.l.b16 %v765
        %v837 = vunpack.c.l.b16 %v766
        %v838 = vunpack.c.l.b16 %v767
        %v839 = vunpack.c.l.b16 %v768
        %v840 = vunpack.c.l.b16 %v769
        %v841 = vunpack.c.l.b16 %v770
        %v842 = vunpack.c.l.b16 %v771
        %v843 = vunpack.c.l.b16 %v772
        %v844 = vunpack.c.l.b16 %v773
        %v845 = vunpack.c.l.b16 %v774
        %v846 = vunpack.c.l.b16 %v775
        %v847 = vunpack.c.l.b16 %v776
        %v848 = vunpack.c.l.b16 %v777
        %v849 = vunpack.c.l.b16 %v778
        %v850 = vunpack.c.l.b16 %v779
        %v851 = vunpack.c.l.b16 %v780
        %v852 = vunpack.c.l.b16 %v781
        %v853 = vunpack.c.l.b16 %v782
        %v854 = vunpack.c.l.b16 %v783
        %v855 = vunpack.c.l.b16 %v784
        %v856 = vunpack.c.l.b16 %v785
        %v857 = vunpack.c.l.b16 %v786
        %v858 = vunpack.c.l.b16 %v787
        %v859 = vunpack.c.l.b16 %v788
        %v860 = vunpack.c.l.b16 %v789
        %v861 = vunpack.c.l.b16 %v790
        %v862 = vunpack.c.l.b16 %v791
        %v863 = vunpack.c.l.b16 %v792
        %v864 = vunpack.c.l.b16 %v793
        %v865 = vpack.c.b16 %v834, %v833
        %v866 = vpack.c.b16 %v836, %v835
        %v867 = vpack.c.b16 %v838, %v837
        %v868 = vpack.c.b16 %v840, %v839
        %v869 = vpack.c.b16 %v842, %v841
        %v870 = vpack.c.b16 %v844, %v843
        %v871 = vpack.c.b16 %v846, %v845
        %v872 = vpack.c.b16 %v848, %v847
        %v873 = vpack.c.b16 %v850, %v849
        %v874 = vpack.c.b16 %v852, %v851
        %v875 = vpack.c.b16 %v854, %v853
        %v876 = vpack.c.b16 %v856, %v855
        %v877 = vpack.c.b16 %v858, %v857
        %v878 = vpack.c.b16 %v860, %v859
        %v879 = vpack.c.b16 %v862, %v861
        %v880 = vpack.c.b16 %v864, %v863
        %897 = vmatprep.subr.bf16.mxu0 0
        %898 = vmatpush1.bf16.msra.mxu0 %v872
        %899 = vmatprep.subr.bf16.mxu0 0
        %900 = vmatpush1.bf16.msra.mxu0 %v871
        %901 = vmatprep.subr.bf16.mxu0 0
        %902 = vmatpush1.bf16.msra.mxu0 %v870
        %903 = vmatprep.subr.bf16.mxu0 0
        %904 = vmatpush1.bf16.msra.mxu0 %v869
        %905 = vmatprep.subr.bf16.mxu0 0
        %906 = vmatpush1.bf16.msra.mxu0 %v868
        %907 = vmatprep.subr.bf16.mxu0 0
        %908 = vmatpush1.bf16.msra.mxu0 %v867
        %909 = vmatprep.subr.bf16.mxu0 0
        %910 = vmatpush1.bf16.msra.mxu0 %v866
        %911 = vmatprep.subr.bf16.mxu0 0
        %912 = vmatpush1.bf16.msra.mxu0 %v865
        %913 = vmatprep.subr.bf16.mxu0 0
        %914 = vmatpush2.bf16.msra.mxu0 %v880
        %915 = vmatprep.subr.bf16.mxu0 0
        %916 = vmatpush2.bf16.msra.mxu0 %v879
        %917 = vmatprep.subr.bf16.mxu0 0
        %918 = vmatpush2.bf16.msra.mxu0 %v878
        %919 = vmatprep.subr.bf16.mxu0 0
        %920 = vmatpush2.bf16.msra.mxu0 %v877
        %921 = vmatprep.subr.bf16.mxu0 0
        %922 = vmatpush2.bf16.msra.mxu0 %v876
        %923 = vmatprep.subr.bf16.mxu0 0
        %924 = vmatpush2.bf16.msra.mxu0 %v875
        %925 = vmatprep.subr.bf16.mxu0 0
        %926 = vmatpush2.bf16.msra.mxu0 %v874
        %927 = vmatprep.subr.bf16.mxu0 0
        %928 = vmatpush2.bf16.msra.mxu0 %v873
        %929 = vmatprep.mubr.bf16.mxu0 %v761
        %930 = vmatmul.mubr.bf16.gmra.mxu0 %v760
        %v931 = vpop.f32.mrf.mxu0
        %v932 = vadd.f32 %v799, %v931
        %v933 = vpop.f32.mrf.mxu0
        %v934 = vpop.f32.mrf.mxu0
        %v935 = vadd.f32 %v799, %v934
        %v936 = vpop.f32.mrf.mxu0
        %937 = vdwg.mxu0
        %938 = vst [vmem:[%s340] sm:$0xff] %v932
        %939 = vst [vmem:[%s340 + $0x8] sm:$0xff] %v935
        %s940 = sand.u32 %s186, 1
        %s941 = scalar_lea.sflag [#allocation4], %s940
        %s942 = sand.u32 %s186, 1
        %s943 = smul.addr %s942, 16
        %s944 = scalar_lea.vmem [#allocation10], %s943
        // Predicated region
        $region65: #{tpu_custom_call.1} parent=47 // pred_check
          %p945 = pneg %p196
        $region66: #{tpu_custom_call.1} parent=47 // pred_check_branch
          %947 = sbr.rel (%p945) target = $region68
        $region67: #{tpu_custom_call.1} parent=47 // pred_region
          %s948 = smul.u32 2, %s26
          %s950 = ssub.s32 256, 256
          %951 = vsyncadd %s941, %s950
          %s952 = smul.addr %s948, 128
          %s953 = scalar_lea.hbm %s7, %s952
          %s954 = sshll.u32 %s944, 4
          %s955 = int_to_ptr.vmem [resolvable:$true] %s954
          %960 = dma.vmem_to_hbm [thread:$0]  %s955, 256, %s953, %s941, 128, 128, 8
        $region68: #{tpu_custom_call.1} parent=47 // pred_fallthru
          _
      $region48: #{tpu_custom_call.1} parent=5 // pred_fallthru
        _
      %p961 = scmp.le.s32.totalorder 2, %s21
      // Predicated region
      $region69: #{tpu_custom_call.1} parent=5 // pred_check
        %p962 = pneg %p961
      $region70: #{tpu_custom_call.1} parent=5 // pred_check_branch
        %964 = sbr.rel (%p962) target = $region72
      $region71: #{tpu_custom_call.1} parent=5 // pred_region
        %s965 = ssub.s32 %s21, 2
        // Predicated region
        $region73: #{tpu_custom_call.1} parent=71 // pred_check
          %p966 = pneg %p202
        $region74: #{tpu_custom_call.1} parent=71 // pred_check_branch
          %968 = sbr.rel (%p966) target = $region76
        $region75: #{tpu_custom_call.1} parent=71 // pred_region
          %s969 = sand.u32 %s187, 1
          %s970 = scalar_lea.sflag [#allocation4], %s969
          %s971 = sand.u32 %s187, 1
          %s972 = smul.addr %s971, 16
          %s973 = scalar_lea.vmem [#allocation10], %s972
          %974 = dma.done %s970, 256
        $region76: #{tpu_custom_call.1} parent=71 // pred_fallthru
          _
      $region72: #{tpu_custom_call.1} parent=5 // pred_fallthru
        _
    $region6: #{tpu_custom_call.1} parent=1 // loop_footer
      %s25 = sadd.s32 1, %s21
    $region7: #{tpu_custom_call.1} parent=1 // loop_footer_branch
      %20 = sbr.rel target = $region3
    $region8: #{tpu_custom_call.1} parent=1 // loop_exit
      _
    %975 = vsyncpa [#allocation3], 1
    %s976 = scalar_lea.sflag [#allocation3], 1
    %977 = vsyncpa %s976, 1
    %978 = vsyncpa [#allocation6], 1
    %979 = vsyncpa [#allocation9], 1
    %980 = vsyncpa [#allocation4], 1
    %s981 = scalar_lea.sflag [#allocation4], 1
    %982 = vsyncpa %s981, 1

</llo_original>
